<compile_context>
chip_gen: v5e
topology: v5e:2x2
jax: 0.10.0
libtpu: 0.0.40
codegen_flags: <defaults>
</compile_context>

<pallas_src>
import jax
import jax.numpy as jnp
from jax.experimental import pallas as pl
from jax.experimental.pallas import tpu as pltpu

BN_EPS = 1e-5
LANE = 128        # vreg lane width: channel dims padded to this for lane-dense stores
SUBLANE = 8
TARGET_TM = 512   # rows per tile: ~1.5 MiB/step at 128-wide channels -> fits v5e's 16 MiB
                  # scoped default and v7x's 64 MiB VMEM with double-buffering headroom
VMEM_LIMIT_BYTES = 32 * 1024 * 1024  # explicit, safe on all generations


def _round_up(x, m):
    return (x + m - 1) // m * m


def _make_kernels(tm, m_true, use_bf16):
    """Build the two grid kernels with tile size / true row count closed over."""

    def mlp(x, w1, b1, w2):
        # NOTE: b2 intentionally omitted -- it cancels under batch-stat BatchNorm.
        if use_bf16:  # optional MXU speedup (v6e/v7x); trades a little precision
            x, w1 = x.astype(jnp.bfloat16), w1.astype(jnp.bfloat16)
        h1 = jnp.dot(x, w1, preferred_element_type=jnp.float32) + b1
        h1 = jnp.maximum(h1, 0.0)
        if use_bf16:
            h1, w2 = h1.astype(jnp.bfloat16), w2.astype(jnp.bfloat16)
        return jnp.dot(h1, w2, preferred_element_type=jnp.float32)

    def stats_kernel(x_ref, w1_ref, b1_ref, w2_ref, gamma_ref, beta_ref,
                     scale_ref, shift_ref, sum_ref, sumsq_ref):
        i = pl.program_id(0)

        @pl.when(i == 0)
        def _():
            sum_ref[...] = jnp.zeros_like(sum_ref)
            sumsq_ref[...] = jnp.zeros_like(sumsq_ref)

        h2 = mlp(x_ref[...], w1_ref[...], b1_ref[...], w2_ref[...])

        # Mask rows beyond the true M (row padding / partial last tile) so the
        # BN statistics are computed over exactly the real batch*spatial rows.
        row = i * tm + jax.lax.broadcasted_iota(jnp.int32, (tm, 1), 0)
        h2m = jnp.where(row < m_true, h2, 0.0)

        sum_ref[...] += jnp.sum(h2m, axis=0, keepdims=True)
        sumsq_ref[...] += jnp.sum(h2m * h2m, axis=0, keepdims=True)

        @pl.when(i == pl.num_programs(0) - 1)
        def _():
            inv_m = 1.0 / m_true
            mean = sum_ref[...] * inv_m
            var = jnp.maximum(sumsq_ref[...] * inv_m - mean * mean, 0.0)
            scale = gamma_ref[...] * jax.lax.rsqrt(var + BN_EPS)
            scale_ref[...] = scale
            shift_ref[...] = beta_ref[...] - mean * scale

    def normalize_kernel(x_ref, w1_ref, b1_ref, w2_ref, scale_ref, shift_ref, o_ref):
        # Recompute the (cheap) MLP rather than re-reading h2 from HBM: at these
        # channel widths the MXU is nearly idle while HBM bytes are the bottleneck.
        h2 = mlp(x_ref[...], w1_ref[...], b1_ref[...], w2_ref[...])
        y = h2 * scale_ref[...] + shift_ref[...]
        o_ref[...] = jnp.maximum(y, 0.0).astype(o_ref.dtype)

    return stats_kernel, normalize_kernel


def apply_node_func(h, params, *, use_bf16_matmul=False):
    """h: (B, D1, D2, C_in) float32.  Returns (B, D1, D2, C_out)."""
    B, D1, D2, C_in = h.shape
    w1, b1, w2, b2, gamma, beta = params
    hidden = w1.shape[1]
    C_out = w2.shape[1]
    M = B * D1 * D2

    # Lane-dense padding of channel dims; row padding to a sublane multiple.
    C_in_p = _round_up(C_in, LANE)
    H_p = _round_up(hidden, LANE)
    C_out_p = _round_up(C_out, LANE)
    M_pad = _round_up(M, SUBLANE)

    x2d = jnp.pad(h.reshape(M, C_in), ((0, M_pad - M), (0, C_in_p - C_in)))
    w1p = jnp.pad(w1, ((0, C_in_p - C_in), (0, H_p - hidden)))
    b1p = jnp.pad(b1, ((0, 0), (0, H_p - hidden)))
    w2p = jnp.pad(w2, ((0, H_p - hidden), (0, C_out_p - C_out)))
    gammap = jnp.pad(gamma, ((0, 0), (0, C_out_p - C_out)))
    betap = jnp.pad(beta, ((0, 0), (0, C_out_p - C_out)))
    del b2  # cancels exactly under batch-statistics BatchNorm (mean subtraction)

    TM = min(TARGET_TM, M_pad)            # both multiples of 8
    grid = (pl.cdiv(M_pad, TM),)

    stats_kernel, normalize_kernel = _make_kernels(TM, M, use_bf16_matmul)

    x_spec = pl.BlockSpec((TM, C_in_p), lambda i: (i, 0))
    w1_spec = pl.BlockSpec((C_in_p, H_p), lambda i: (0, 0))
    b1_spec = pl.BlockSpec((1, H_p), lambda i: (0, 0))
    w2_spec = pl.BlockSpec((H_p, C_out_p), lambda i: (0, 0))
    vec_spec = pl.BlockSpec((1, C_out_p), lambda i: (0, 0))

    flops = 2 * M * (C_in_p * H_p + H_p * C_out_p)
    bytes_x = 4 * M_pad * C_in_p
    bytes_o = 4 * M_pad * C_out_p

    # Pass 1: global per-channel BN stats, folded into (scale, shift) at the last step.
    scale, shift = pl.pallas_call(
        stats_kernel,
        out_shape=(jax.ShapeDtypeStruct((1, C_out_p), jnp.float32),
                   jax.ShapeDtypeStruct((1, C_out_p), jnp.float32)),
        grid=grid,
        in_specs=[x_spec, w1_spec, b1_spec, w2_spec, vec_spec, vec_spec],
        out_specs=(vec_spec, vec_spec),
        scratch_shapes=[pltpu.VMEM((1, C_out_p), jnp.float32),
                        pltpu.VMEM((1, C_out_p), jnp.float32)],
        compiler_params=pltpu.CompilerParams(
            dimension_semantics=("arbitrary",),
            vmem_limit_bytes=VMEM_LIMIT_BYTES),
        cost_estimate=pl.CostEstimate(flops=flops, transcendentals=0,
                                      bytes_accessed=bytes_x),
    )(x2d, w1p, b1p, w2p, gammap, betap)

    # Pass 2: recompute MLP per tile, apply folded BN affine + ReLU (fully parallel).
    out2d = pl.pallas_call(
        normalize_kernel,
        out_shape=jax.ShapeDtypeStruct((M_pad, C_out_p), jnp.float32),
        grid=grid,
        in_specs=[x_spec, w1_spec, b1_spec, w2_spec, vec_spec, vec_spec],
        out_specs=pl.BlockSpec((TM, C_out_p), lambda i: (i, 0)),
        compiler_params=pltpu.CompilerParams(
            dimension_semantics=("parallel",),
            vmem_limit_bytes=VMEM_LIMIT_BYTES),
        cost_estimate=pl.CostEstimate(flops=flops, transcendentals=0,
                                      bytes_accessed=bytes_x + bytes_o),
    )(x2d, w1p, b1p, w2p, scale, shift)

    return out2d[:M, :C_out].reshape(B, D1, D2, C_out)


def init_params(key, in_dim, hidden_dim, out_dim):
    """Deterministic init mimicking PyTorch defaults (U(-1/sqrt(fan_in), +1/sqrt(fan_in)))."""
    k1, k2, k3, k4 = jax.random.split(key, 4)
    bound1 = 1.0 / jnp.sqrt(in_dim)
    bound2 = 1.0 / jnp.sqrt(hidden_dim)
    w1 = jax.random.uniform(k1, (in_dim, hidden_dim), jnp.float32, -bound1, bound1)
    b1 = jax.random.uniform(k2, (1, hidden_dim), jnp.float32, -bound1, bound1)
    w2 = jax.random.uniform(k3, (hidden_dim, out_dim), jnp.float32, -bound2, bound2)
    b2 = jax.random.uniform(k4, (1, out_dim), jnp.float32, -bound2, bound2)
    gamma = jnp.ones((1, out_dim), jnp.float32)   # BatchNorm2d.weight init
    beta = jnp.zeros((1, out_dim), jnp.float32)   # BatchNorm2d.bias init
    return (w1, b1, w2, b2, gamma, beta)


def _reference(h, params):
    """Pure-JAX reference of the same forward pass (keeps b2; BN cancels it)."""
    w1, b1, w2, b2, gamma, beta = params
    B, D1, D2, _ = h.shape
    x = h.reshape(-1, h.shape[-1])
    h1 = jnp.maximum(x @ w1 + b1, 0.0)
    h2 = h1 @ w2 + b2
    mean = h2.mean(axis=0, keepdims=True)
    var = ((h2 - mean) ** 2).mean(axis=0, keepdims=True)
    y = gamma * (h2 - mean) / jnp.sqrt(var + BN_EPS) + beta
    return jnp.maximum(y, 0.0).reshape(B, D1, D2, -1)


if __name__ == "__main__":
    key = jax.random.PRNGKey(0)
    k_x, k_p = jax.random.split(key)

    # Small shapes: batch=2, spatial 8x8, in_dim=16, hidden=32, output_dim=16
    B, D1, D2 = 2, 8, 8
    in_dim, hidden_dim, out_dim = 16, 32, 16

    h = jax.random.normal(k_x, (B, D1, D2, in_dim), jnp.float32)
    params = init_params(k_p, in_dim, hidden_dim, out_dim)

    # f32 matmuls by default to preserve the PyTorch module's numerics exactly;
    # set use_bf16_matmul=True for MXU-peak bf16 operands on v6e/v7x.
    out = apply_node_func(h, params, use_bf16_matmul=False)
    out = jax.block_until_ready(out)

    ref = _reference(h, params)
    assert out.shape == (B, D1, D2, out_dim)
    assert jnp.allclose(out, ref, atol=1e-4, rtol=1e-4), "mismatch vs JAX reference"

    print("KERNEL_OK")
</pallas_src>

<mosaic_0001>
module attributes {stable_mosaic.version = 11 : i64} {
  func.func @stats_kernel(%arg0: i32, %arg1: memref<128x128xf32, #tpu.memory_space<vmem>>, %arg2: memref<128x128xf32, #tpu.memory_space<vmem>>, %arg3: memref<1x128xf32, #tpu.memory_space<vmem>>, %arg4: memref<128x128xf32, #tpu.memory_space<vmem>>, %arg5: memref<1x128xf32, #tpu.memory_space<vmem>>, %arg6: memref<1x128xf32, #tpu.memory_space<vmem>>, %arg7: memref<1x128xf32, #tpu.memory_space<vmem>>, %arg8: memref<1x128xf32, #tpu.memory_space<vmem>>, %arg9: memref<1x128xf32, #tpu.memory_space<vmem>>, %arg10: memref<1x128xf32, #tpu.memory_space<vmem>>) attributes {dimension_semantics = [#tpu.dimension_semantics<arbitrary>], iteration_bounds = array<i64: 1>, scalar_prefetch = 0 : i64, scratch_operands = 2 : i64, tpu.core_type = #tpu.core_type<tc>, window_params = [{transform_indices = @transform_0, window_bounds = array<i64: 128, 128>}, {pipeline_mode = #tpu.pipeline_mode<synchronous>, transform_indices = @transform_1, window_bounds = array<i64: 128, 128>}, {pipeline_mode = #tpu.pipeline_mode<synchronous>, transform_indices = @transform_2, window_bounds = array<i64: 1, 128>}, {pipeline_mode = #tpu.pipeline_mode<synchronous>, transform_indices = @transform_3, window_bounds = array<i64: 128, 128>}, {pipeline_mode = #tpu.pipeline_mode<synchronous>, transform_indices = @transform_4, window_bounds = array<i64: 1, 128>}, {pipeline_mode = #tpu.pipeline_mode<synchronous>, transform_indices = @transform_5, window_bounds = array<i64: 1, 128>}, {pipeline_mode = #tpu.pipeline_mode<synchronous>, transform_indices = @transform_6, window_bounds = array<i64: 1, 128>}, {pipeline_mode = #tpu.pipeline_mode<synchronous>, transform_indices = @transform_7, window_bounds = array<i64: 1, 128>}]} {
    %c0_i32 = arith.constant 0 : i32
    %0 = arith.cmpi eq, %arg0, %c0_i32 : i32
    %1 = arith.extui %0 : i1 to i32
    %c0_i32_0 = arith.constant 0 : i32
    %2 = arith.cmpi ne, %1, %c0_i32_0 : i32
    scf.if %2 {
      %cst_24 = arith.constant 0.000000e+00 : f32
      %37 = vector.broadcast %cst_24 : f32 to vector<1x128xf32>
      %c0_25 = arith.constant 0 : index
      %c0_26 = arith.constant 0 : index
      %38 = vector.load %arg9[%c0_25, %c0_26] : memref<1x128xf32, #tpu.memory_space<vmem>>, vector<1x128xf32>
      tpu.vector_store %arg9[%c0_25, %c0_26], %37 {strides = array<i32>} : memref<1x128xf32, #tpu.memory_space<vmem>>, vector<1x128xf32>,
      %cst_27 = arith.constant 0.000000e+00 : f32
      %39 = vector.broadcast %cst_27 : f32 to vector<1x128xf32>
      %c0_28 = arith.constant 0 : index
      %c0_29 = arith.constant 0 : index
      %40 = vector.load %arg10[%c0_28, %c0_29] : memref<1x128xf32, #tpu.memory_space<vmem>>, vector<1x128xf32>
      tpu.vector_store %arg10[%c0_28, %c0_29], %39 {strides = array<i32>} : memref<1x128xf32, #tpu.memory_space<vmem>>, vector<1x128xf32>,
    } else {
    }
    %c0 = arith.constant 0 : index
    %c0_1 = arith.constant 0 : index
    %3 = vector.load %arg1[%c0, %c0_1] : memref<128x128xf32, #tpu.memory_space<vmem>>, vector<128x128xf32>
    %c0_2 = arith.constant 0 : index
    %c0_3 = arith.constant 0 : index
    %4 = vector.load %arg2[%c0_2, %c0_3] : memref<128x128xf32, #tpu.memory_space<vmem>>, vector<128x128xf32>
    %c0_4 = arith.constant 0 : index
    %c0_5 = arith.constant 0 : index
    %5 = vector.load %arg3[%c0_4, %c0_5] : memref<1x128xf32, #tpu.memory_space<vmem>>, vector<1x128xf32>
    %c0_6 = arith.constant 0 : index
    %c0_7 = arith.constant 0 : index
    %6 = vector.load %arg4[%c0_6, %c0_7] : memref<128x128xf32, #tpu.memory_space<vmem>>, vector<128x128xf32>
    %cst = arith.constant dense<0.000000e+00> : vector<128x128xf32>
    %7 = tpu.matmul %3, %4, %cst {dimension_numbers = #tpu.dot_dimension_numbers<[1], [0], [0], [1], [0, 0, 1, 1], [], []>} : vector<128x128xf32>, vector<128x128xf32>, vector<128x128xf32> -> vector<128x128xf32>
    %8 = vector.broadcast %5 : vector<1x128xf32> to vector<128x128xf32>
    %9 = arith.addf %7, %8 : vector<128x128xf32>
    %cst_8 = arith.constant 0.000000e+00 : f32
    %10 = vector.broadcast %cst_8 : f32 to vector<128x128xf32>
    %11 = arith.maximumf %9, %10 : vector<128x128xf32>
    %cst_9 = arith.constant dense<0.000000e+00> : vector<128x128xf32>
    %12 = tpu.matmul %11, %6, %cst_9 {dimension_numbers = #tpu.dot_dimension_numbers<[1], [0], [0], [1], [0, 0, 1, 1], [], []>} : vector<128x128xf32>, vector<128x128xf32>, vector<128x128xf32> -> vector<128x128xf32>
    %c128_i32 = arith.constant 128 : i32
    %13 = arith.muli %arg0, %c128_i32 : i32
    %14 = tpu.iota {dimensions = array<i32: 0>} : vector<128x1xi32>
    %15 = vector.broadcast %13 : i32 to vector<128x1xi32>
    %16 = arith.addi %15, %14 : vector<128x1xi32>
    %c128_i32_10 = arith.constant 128 : i32
    %17 = vector.broadcast %c128_i32_10 : i32 to vector<128x1xi32>
    %18 = arith.cmpi slt, %16, %17 : vector<128x1xi32>
    %cst_11 = arith.constant 0.000000e+00 : f32
    %19 = vector.shape_cast %18 : vector<128x1xi1> to vector<128x1xi1>
    %20 = vector.broadcast %19 : vector<128x1xi1> to vector<128x128xi1>
    %21 = vector.broadcast %cst_11 : f32 to vector<128x128xf32>
    %22 = arith.select %20, %12, %21 : vector<128x128xi1>, vector<128x128xf32>
    %c0_12 = arith.constant 0 : index
    %c0_13 = arith.constant 0 : index
    %23 = vector.load %arg9[%c0_12, %c0_13] : memref<1x128xf32, #tpu.memory_space<vmem>>, vector<1x128xf32>
    %cst_14 = arith.constant dense<0.000000e+00> : vector<128xf32>
    %24 = vector.multi_reduction <add>, %22, %cst_14 [0] : vector<128x128xf32> to vector<128xf32>
    %25 = vector.shape_cast %24 : vector<128xf32> to vector<1x128xf32>
    %26 = arith.addf %23, %25 : vector<1x128xf32>
    %c0_15 = arith.constant 0 : index
    %c0_16 = arith.constant 0 : index
    %27 = vector.load %arg9[%c0_15, %c0_16] : memref<1x128xf32, #tpu.memory_space<vmem>>, vector<1x128xf32>
    tpu.vector_store %arg9[%c0_15, %c0_16], %26 {strides = array<i32>} : memref<1x128xf32, #tpu.memory_space<vmem>>, vector<1x128xf32>,
    %c0_17 = arith.constant 0 : index
    %c0_18 = arith.constant 0 : index
    %28 = vector.load %arg10[%c0_17, %c0_18] : memref<1x128xf32, #tpu.memory_space<vmem>>, vector<1x128xf32>
    %29 = arith.mulf %22, %22 : vector<128x128xf32>
    %cst_19 = arith.constant dense<0.000000e+00> : vector<128xf32>
    %30 = vector.multi_reduction <add>, %29, %cst_19 [0] : vector<128x128xf32> to vector<128xf32>
    %31 = vector.shape_cast %30 : vector<128xf32> to vector<1x128xf32>
    %32 = arith.addf %28, %31 : vector<1x128xf32>
    %c0_20 = arith.constant 0 : index
    %c0_21 = arith.constant 0 : index
    %33 = vector.load %arg10[%c0_20, %c0_21] : memref<1x128xf32, #tpu.memory_space<vmem>>, vector<1x128xf32>
    tpu.vector_store %arg10[%c0_20, %c0_21], %32 {strides = array<i32>} : memref<1x128xf32, #tpu.memory_space<vmem>>, vector<1x128xf32>,
    %c0_i32_22 = arith.constant 0 : i32
    %34 = arith.cmpi eq, %arg0, %c0_i32_22 : i32
    %35 = arith.extui %34 : i1 to i32
    %c0_i32_23 = arith.constant 0 : i32
    %36 = arith.cmpi ne, %35, %c0_i32_23 : i32
    scf.if %36 {
      %c0_24 = arith.constant 0 : index
      %c0_25 = arith.constant 0 : index
      %37 = vector.load %arg9[%c0_24, %c0_25] : memref<1x128xf32, #tpu.memory_space<vmem>>, vector<1x128xf32>
      %cst_26 = arith.constant 7.812500e-03 : f32
      %38 = vector.broadcast %cst_26 : f32 to vector<1x128xf32>
      %39 = arith.mulf %37, %38 : vector<1x128xf32>
      %c0_27 = arith.constant 0 : index
      %c0_28 = arith.constant 0 : index
      %40 = vector.load %arg10[%c0_27, %c0_28] : memref<1x128xf32, #tpu.memory_space<vmem>>, vector<1x128xf32>
      %cst_29 = arith.constant 7.812500e-03 : f32
      %41 = vector.broadcast %cst_29 : f32 to vector<1x128xf32>
      %42 = arith.mulf %40, %41 : vector<1x128xf32>
      %43 = arith.mulf %39, %39 : vector<1x128xf32>
      %44 = arith.subf %42, %43 : vector<1x128xf32>
      %cst_30 = arith.constant 0.000000e+00 : f32
      %45 = vector.broadcast %cst_30 : f32 to vector<1x128xf32>
      %46 = arith.maximumf %44, %45 : vector<1x128xf32>
      %c0_31 = arith.constant 0 : index
      %c0_32 = arith.constant 0 : index
      %47 = vector.load %arg5[%c0_31, %c0_32] : memref<1x128xf32, #tpu.memory_space<vmem>>, vector<1x128xf32>
      %cst_33 = arith.constant 9.99999974E-6 : f32
      %48 = vector.broadcast %cst_33 : f32 to vector<1x128xf32>
      %49 = arith.addf %46, %48 : vector<1x128xf32>
      %50 = math.rsqrt %49 : vector<1x128xf32>
      %51 = arith.mulf %47, %50 : vector<1x128xf32>
      %c0_34 = arith.constant 0 : index
      %c0_35 = arith.constant 0 : index
      %52 = vector.load %arg7[%c0_34, %c0_35] : memref<1x128xf32, #tpu.memory_space<vmem>>, vector<1x128xf32>
      tpu.vector_store %arg7[%c0_34, %c0_35], %51 {strides = array<i32>} : memref<1x128xf32, #tpu.memory_space<vmem>>, vector<1x128xf32>,
      %c0_36 = arith.constant 0 : index
      %c0_37 = arith.constant 0 : index
      %53 = vector.load %arg6[%c0_36, %c0_37] : memref<1x128xf32, #tpu.memory_space<vmem>>, vector<1x128xf32>
      %54 = arith.mulf %39, %51 : vector<1x128xf32>
      %55 = arith.subf %53, %54 : vector<1x128xf32>
      %c0_38 = arith.constant 0 : index
      %c0_39 = arith.constant 0 : index
      %56 = vector.load %arg8[%c0_38, %c0_39] : memref<1x128xf32, #tpu.memory_space<vmem>>, vector<1x128xf32>
      tpu.vector_store %arg8[%c0_38, %c0_39], %55 {strides = array<i32>} : memref<1x128xf32, #tpu.memory_space<vmem>>, vector<1x128xf32>,
    } else {
    }
    return
  }
  func.func @transform_0(%arg0: i32) -> (i32, i32) {
    %c0_i32 = arith.constant 0 : i32
    %c0_i32_0 = arith.constant 0 : i32
    return %arg0, %c0_i32 : i32, i32
  }
  func.func @transform_1(%arg0: i32) -> (i32, i32) {
    %c0_i32 = arith.constant 0 : i32
    %c0_i32_0 = arith.constant 0 : i32
    %c0_i32_1 = arith.constant 0 : i32
    return %c0_i32, %c0_i32_0 : i32, i32
  }
  func.func @transform_2(%arg0: i32) -> (i32, i32) {
    %c0_i32 = arith.constant 0 : i32
    %c0_i32_0 = arith.constant 0 : i32
    %c0_i32_1 = arith.constant 0 : i32
    return %c0_i32, %c0_i32_0 : i32, i32
  }
  func.func @transform_3(%arg0: i32) -> (i32, i32) {
    %c0_i32 = arith.constant 0 : i32
    %c0_i32_0 = arith.constant 0 : i32
    %c0_i32_1 = arith.constant 0 : i32
    return %c0_i32, %c0_i32_0 : i32, i32
  }
  func.func @transform_4(%arg0: i32) -> (i32, i32) {
    %c0_i32 = arith.constant 0 : i32
    %c0_i32_0 = arith.constant 0 : i32
    %c0_i32_1 = arith.constant 0 : i32
    return %c0_i32, %c0_i32_0 : i32, i32
  }
  func.func @transform_5(%arg0: i32) -> (i32, i32) {
    %c0_i32 = arith.constant 0 : i32
    %c0_i32_0 = arith.constant 0 : i32
    %c0_i32_1 = arith.constant 0 : i32
    return %c0_i32, %c0_i32_0 : i32, i32
  }
  func.func @transform_6(%arg0: i32) -> (i32, i32) {
    %c0_i32 = arith.constant 0 : i32
    %c0_i32_0 = arith.constant 0 : i32
    %c0_i32_1 = arith.constant 0 : i32
    return %c0_i32, %c0_i32_0 : i32, i32
  }
  func.func @transform_7(%arg0: i32) -> (i32, i32) {
    %c0_i32 = arith.constant 0 : i32
    %c0_i32_0 = arith.constant 0 : i32
    %c0_i32_1 = arith.constant 0 : i32
    return %c0_i32, %c0_i32_0 : i32, i32
  }
}

</mosaic_0001>

<llo_original>
// kernel: tpu_custom_call.1
$region0: #{tpu_custom_call.1}
  #allocation0 [shape = 'u32[]', space=smem, size = 0x4, offset = 0x4, fixed_abs, tag = 'smem constant byte address 0x4 - core index']
  #allocation1 [shape = 'u32[72,128]{1,0:T(1,128)}', space=vmem, size = 0x9000, scoped, tag = 'internal scratch']
  #allocation2 [shape = 'f32[1,128]{1,0:T(1,128)}', space=vmem, size = 0x200, scoped, tag = 'scratch operand']
  #allocation3 [shape = 'f32[1,128]{1,0:T(1,128)}', space=vmem, size = 0x200, scoped, tag = 'scratch operand']
  %s0 = inlined_call_operand.hbm [shape: f32[128,128], index: 0, kind: input, shape index: {}]
  %s1 = inlined_call_operand.hbm [shape: f32[128,128], index: 1, kind: input, shape index: {}]
  %s2 = inlined_call_operand.vmem [shape: f32[1,128], index: 2, kind: input, shape index: {}]
  %s3 = inlined_call_operand.hbm [shape: f32[128,128], index: 3, kind: input, shape index: {}]
  %s4 = inlined_call_operand.vmem [shape: f32[1,128], index: 4, kind: input, shape index: {}]
  %s5 = inlined_call_operand.vmem [shape: f32[1,128], index: 5, kind: input, shape index: {}]
  %s6 = inlined_call_operand.hbm [shape: f32[1,128], index: 6, kind: output, shape index: {0}]
  %s7 = inlined_call_operand.hbm [shape: f32[1,128], index: 7, kind: output, shape index: {1}]
  %8 = xla_tuple %s6, %s7
  %s9 = sld [smem:[#allocation0]]
  $region62: #{tpu_custom_call.1} parent=0
    _
  %s11 = ssub.s32 1, %s9
  %s12 = scalar_select 0, %s11, %s9
  $region1: #{tpu_custom_call.1} parent=0
    #allocation4 [shape = 'u8[65536]{0}', space=vmem, size = 0x10000, scoped, tag = 'input window, operand 0, single buffered']
    #allocation5 [shape = 's32[1]{0}', space=sflag, size = 0x4, scoped, tag = 'scoped memory for tpu_custom_call.1']
    #allocation6 [shape = 's32[1]{0}', space=sflag, size = 0x4, scoped, tag = 'scoped memory for tpu_custom_call.1']
    #allocation7 [shape = 'u8[65536]{0}', space=vmem, size = 0x10000, scoped, tag = 'input window, operand 1, single buffered']
    #allocation8 [shape = 's32[1]{0}', space=sflag, size = 0x4, scoped, tag = 'scoped memory for tpu_custom_call.1']
    #allocation9 [shape = 'u8[65536]{0}', space=vmem, size = 0x10000, scoped, tag = 'input window, operand 3, single buffered']
    #allocation10 [shape = 'u8[512]{0}', space=vmem, size = 0x400, scoped, tag = 'output window, operand 0, single buffered']
    #allocation11 [shape = 'u8[512]{0}', space=vmem, size = 0x400, scoped, tag = 'output window, operand 1, single buffered']
    #allocation12 [shape = 's32[1]{0}', space=sflag, size = 0x4, scoped, tag = 'scoped memory for tpu_custom_call.1']
    %13 = vsyncpa [#allocation5], 0
    %14 = vsyncpa [#allocation8], 0
    %15 = vsyncpa [#allocation6], 0
    %16 = vsyncpa [#allocation12], 0
    // Predicated region
    $region2: #{tpu_custom_call.1} parent=1 // pred_check
      _
    $region3: #{tpu_custom_call.1} parent=1 // pred_check_branch
      %18 = sbr.rel (0) target = $region5
    $region4: #{tpu_custom_call.1} parent=1 // pred_region
      %20 = vsyncadd [#allocation5], 0
      %s21 = sshll.u32 %s0, 4
      %s22 = int_to_ptr.hbm [resolvable:$true] %s21
      %s23 = sshll.u32 [#allocation4], 4
      %s24 = int_to_ptr.vmem [resolvable:$true] %s23
      %29 = dma.hbm_to_vmem [thread:$0]  %s22, 2048, %s24, [#allocation5], 128, 128, 8
    $region5: #{tpu_custom_call.1} parent=1 // pred_fallthru
      _
    // Predicated region
    $region6: #{tpu_custom_call.1} parent=1 // pred_check
      _
    $region7: #{tpu_custom_call.1} parent=1 // pred_check_branch
      %31 = sbr.rel (0) target = $region9
    $region8: #{tpu_custom_call.1} parent=1 // pred_region
      %33 = vsyncadd [#allocation8], 0
      %s34 = sshll.u32 %s1, 4
      %s35 = int_to_ptr.hbm [resolvable:$true] %s34
      %s36 = sshll.u32 [#allocation7], 4
      %s37 = int_to_ptr.vmem [resolvable:$true] %s36
      %42 = dma.hbm_to_vmem [thread:$0]  %s35, 2048, %s37, [#allocation8], 128, 128, 8
    $region9: #{tpu_custom_call.1} parent=1 // pred_fallthru
      _
    // Predicated region
    $region10: #{tpu_custom_call.1} parent=1 // pred_check
      _
    $region11: #{tpu_custom_call.1} parent=1 // pred_check_branch
      %44 = sbr.rel (0) target = $region13
    $region12: #{tpu_custom_call.1} parent=1 // pred_region
      _
    $region13: #{tpu_custom_call.1} parent=1 // pred_fallthru
      _
    // Predicated region
    $region14: #{tpu_custom_call.1} parent=1 // pred_check
      _
    $region15: #{tpu_custom_call.1} parent=1 // pred_check_branch
      %46 = sbr.rel (0) target = $region17
    $region16: #{tpu_custom_call.1} parent=1 // pred_region
      %48 = vsyncadd [#allocation8], 0
      %s49 = sshll.u32 %s3, 4
      %s50 = int_to_ptr.hbm [resolvable:$true] %s49
      %s51 = sshll.u32 [#allocation9], 4
      %s52 = int_to_ptr.vmem [resolvable:$true] %s51
      %57 = dma.hbm_to_vmem [thread:$0]  %s50, 2048, %s52, [#allocation8], 128, 128, 8
    $region17: #{tpu_custom_call.1} parent=1 // pred_fallthru
      _
    // Predicated region
    $region18: #{tpu_custom_call.1} parent=1 // pred_check
      _
    $region19: #{tpu_custom_call.1} parent=1 // pred_check_branch
      %59 = sbr.rel (0) target = $region21
    $region20: #{tpu_custom_call.1} parent=1 // pred_region
      _
    $region21: #{tpu_custom_call.1} parent=1 // pred_fallthru
      _
    // Predicated region
    $region22: #{tpu_custom_call.1} parent=1 // pred_check
      _
    $region23: #{tpu_custom_call.1} parent=1 // pred_check_branch
      %61 = sbr.rel (0) target = $region25
    $region24: #{tpu_custom_call.1} parent=1 // pred_region
      _
    $region25: #{tpu_custom_call.1} parent=1 // pred_fallthru
      _
    // Predicated region
    $region26: #{tpu_custom_call.1} parent=1 // pred_check
      _
    $region27: #{tpu_custom_call.1} parent=1 // pred_check_branch
      %63 = sbr.rel (0) target = $region29
    $region28: #{tpu_custom_call.1} parent=1 // pred_region
      %65 = dma.done [#allocation5], 2048
    $region29: #{tpu_custom_call.1} parent=1 // pred_fallthru
      _
    // Predicated region
    $region30: #{tpu_custom_call.1} parent=1 // pred_check
      _
    $region31: #{tpu_custom_call.1} parent=1 // pred_check_branch
      %67 = sbr.rel (0) target = $region33
    $region32: #{tpu_custom_call.1} parent=1 // pred_region
      %69 = dma.done [#allocation8], 2048
    $region33: #{tpu_custom_call.1} parent=1 // pred_fallthru
      _
    // Predicated region
    $region34: #{tpu_custom_call.1} parent=1 // pred_check
      _
    $region35: #{tpu_custom_call.1} parent=1 // pred_check_branch
      %71 = sbr.rel (0) target = $region37
    $region36: #{tpu_custom_call.1} parent=1 // pred_region
      %73 = dma.done [#allocation8], 2048
    $region37: #{tpu_custom_call.1} parent=1 // pred_fallthru
      _
    %p74 = scmp.eq.s32.totalorder 0, 0
    // Predicated region
    $region38: #{tpu_custom_call.1} parent=1 // pred_check
      %p75 = pneg %p74
    $region39: #{tpu_custom_call.1} parent=1 // pred_check_branch
      %77 = sbr.rel (%p75) target = $region41
    $region40: #{tpu_custom_call.1} parent=1 // pred_region
      %78 = vst [vmem:[#allocation2] sm:$0x1] 0.0
      %79 = vst [vmem:[#allocation3] sm:$0x1] 0.0
    $region41: #{tpu_custom_call.1} parent=1 // pred_fallthru
      _
    %v80 = vld [vmem:[#allocation4] sm:$0xff]
    %v81 = vld [vmem:[#allocation4 + $0x8] sm:$0xff]
    %v82 = vld [vmem:[#allocation4 + $0x10] sm:$0xff]
    %v83 = vld [vmem:[#allocation4 + $0x18] sm:$0xff]
    %v84 = vld [vmem:[#allocation4 + $0x20] sm:$0xff]
    %v85 = vld [vmem:[#allocation4 + $0x28] sm:$0xff]
    %v86 = vld [vmem:[#allocation4 + $0x30] sm:$0xff]
    %v87 = vld [vmem:[#allocation4 + $0x38] sm:$0xff]
    %v88 = vld [vmem:[#allocation4 + $0x40] sm:$0xff]
    %v89 = vld [vmem:[#allocation4 + $0x48] sm:$0xff]
    %v90 = vld [vmem:[#allocation4 + $0x50] sm:$0xff]
    %v91 = vld [vmem:[#allocation4 + $0x58] sm:$0xff]
    %v92 = vld [vmem:[#allocation4 + $0x60] sm:$0xff]
    %v93 = vld [vmem:[#allocation4 + $0x68] sm:$0xff]
    %v94 = vld [vmem:[#allocation4 + $0x70] sm:$0xff]
    %v95 = vld [vmem:[#allocation4 + $0x78] sm:$0xff]
    %v96 = vld [vmem:[#allocation7] sm:$0xff]
    %v97 = vld [vmem:[#allocation7 + $0x8] sm:$0xff]
    %v98 = vld [vmem:[#allocation7 + $0x10] sm:$0xff]
    %v99 = vld [vmem:[#allocation7 + $0x18] sm:$0xff]
    %v100 = vld [vmem:[#allocation7 + $0x20] sm:$0xff]
    %v101 = vld [vmem:[#allocation7 + $0x28] sm:$0xff]
    %v102 = vld [vmem:[#allocation7 + $0x30] sm:$0xff]
    %v103 = vld [vmem:[#allocation7 + $0x38] sm:$0xff]
    %v104 = vld [vmem:[#allocation7 + $0x40] sm:$0xff]
    %v105 = vld [vmem:[#allocation7 + $0x48] sm:$0xff]
    %v106 = vld [vmem:[#allocation7 + $0x50] sm:$0xff]
    %v107 = vld [vmem:[#allocation7 + $0x58] sm:$0xff]
    %v108 = vld [vmem:[#allocation7 + $0x60] sm:$0xff]
    %v109 = vld [vmem:[#allocation7 + $0x68] sm:$0xff]
    %v110 = vld [vmem:[#allocation7 + $0x70] sm:$0xff]
    %v111 = vld [vmem:[#allocation7 + $0x78] sm:$0xff]
    %v112 = vld [vmem:[%s2] sm:$0x1]
    %v113 = vld [vmem:[#allocation9] sm:$0xff]
    %v114 = vld [vmem:[#allocation9 + $0x8] sm:$0xff]
    %v115 = vld [vmem:[#allocation9 + $0x10] sm:$0xff]
    %v116 = vld [vmem:[#allocation9 + $0x18] sm:$0xff]
    %v117 = vld [vmem:[#allocation9 + $0x20] sm:$0xff]
    %v118 = vld [vmem:[#allocation9 + $0x28] sm:$0xff]
    %v119 = vld [vmem:[#allocation9 + $0x30] sm:$0xff]
    %v120 = vld [vmem:[#allocation9 + $0x38] sm:$0xff]
    %v121 = vld [vmem:[#allocation9 + $0x40] sm:$0xff]
    %v122 = vld [vmem:[#allocation9 + $0x48] sm:$0xff]
    %v123 = vld [vmem:[#allocation9 + $0x50] sm:$0xff]
    %v124 = vld [vmem:[#allocation9 + $0x58] sm:$0xff]
    %v125 = vld [vmem:[#allocation9 + $0x60] sm:$0xff]
    %v126 = vld [vmem:[#allocation9 + $0x68] sm:$0xff]
    %v127 = vld [vmem:[#allocation9 + $0x70] sm:$0xff]
    %v128 = vld [vmem:[#allocation9 + $0x78] sm:$0xff]
    %v130 = vperm.slane %v112, 0
    %132 = vmatpush.msra.mxu0 %v111
    %133 = vmatpush.msra.mxu0 %v110
    %134 = vmatpush.msra.mxu0 %v109
    %135 = vmatpush.msra.mxu0 %v108
    %136 = vmatpush.msra.mxu0 %v107
    %137 = vmatpush.msra.mxu0 %v106
    %138 = vmatpush.msra.mxu0 %v105
    %139 = vmatpush.msra.mxu0 %v104
    %140 = vmatpush.msra.mxu0 %v103
    %141 = vmatpush.msra.mxu0 %v102
    %142 = vmatpush.msra.mxu0 %v101
    %143 = vmatpush.msra.mxu0 %v100
    %144 = vmatpush.msra.mxu0 %v99
    %145 = vmatpush.msra.mxu0 %v98
    %146 = vmatpush.msra.mxu0 %v97
    %147 = vmatpush.msra.mxu0 %v96
    %148 = vmatmul.f32.gmra.mxu0 %v80
    %v149 = vpop.f32.mrf.mxu0
    %v150 = vadd.f32 %v130, %v149
    %151 = vmatmul.f32.gmra.mxu0 %v81
    %v152 = vpop.f32.mrf.mxu0
    %v153 = vadd.f32 %v130, %v152
    %154 = vmatmul.f32.gmra.mxu0 %v82
    %v155 = vpop.f32.mrf.mxu0
    %v156 = vadd.f32 %v130, %v155
    %157 = vmatmul.f32.gmra.mxu0 %v83
    %v158 = vpop.f32.mrf.mxu0
    %v159 = vadd.f32 %v130, %v158
    %160 = vmatmul.f32.gmra.mxu0 %v84
    %v161 = vpop.f32.mrf.mxu0
    %v162 = vadd.f32 %v130, %v161
    %163 = vmatmul.f32.gmra.mxu0 %v85
    %v164 = vpop.f32.mrf.mxu0
    %v165 = vadd.f32 %v130, %v164
    %166 = vmatmul.f32.gmra.mxu0 %v86
    %v167 = vpop.f32.mrf.mxu0
    %v168 = vadd.f32 %v130, %v167
    %169 = vmatmul.f32.gmra.mxu0 %v87
    %v170 = vpop.f32.mrf.mxu0
    %v171 = vadd.f32 %v130, %v170
    %172 = vmatmul.f32.gmra.mxu0 %v88
    %v173 = vpop.f32.mrf.mxu0
    %v174 = vadd.f32 %v130, %v173
    %175 = vmatmul.f32.gmra.mxu0 %v89
    %v176 = vpop.f32.mrf.mxu0
    %v177 = vadd.f32 %v130, %v176
    %178 = vmatmul.f32.gmra.mxu0 %v90
    %v179 = vpop.f32.mrf.mxu0
    %v180 = vadd.f32 %v130, %v179
    %181 = vmatmul.f32.gmra.mxu0 %v91
    %v182 = vpop.f32.mrf.mxu0
    %v183 = vadd.f32 %v130, %v182
    %184 = vmatmul.f32.gmra.mxu0 %v92
    %v185 = vpop.f32.mrf.mxu0
    %v186 = vadd.f32 %v130, %v185
    %187 = vmatmul.f32.gmra.mxu0 %v93
    %v188 = vpop.f32.mrf.mxu0
    %v189 = vadd.f32 %v130, %v188
    %190 = vmatmul.f32.gmra.mxu0 %v94
    %v191 = vpop.f32.mrf.mxu0
    %v192 = vadd.f32 %v130, %v191
    %193 = vmatmul.f32.gmra.mxu0 %v95
    %v194 = vpop.f32.mrf.mxu0
    %v195 = vadd.f32 %v130, %v194
    %196 = vdwg.mxu0
    %v197 = vmax.f32 %v150, 0.0
    %v198 = vmax.f32 %v153, 0.0
    %v199 = vmax.f32 %v156, 0.0
    %v200 = vmax.f32 %v159, 0.0
    %v201 = vmax.f32 %v162, 0.0
    %v202 = vmax.f32 %v165, 0.0
    %v203 = vmax.f32 %v168, 0.0
    %v204 = vmax.f32 %v171, 0.0
    %v205 = vmax.f32 %v174, 0.0
    %v206 = vmax.f32 %v177, 0.0
    %v207 = vmax.f32 %v180, 0.0
    %v208 = vmax.f32 %v183, 0.0
    %v209 = vmax.f32 %v186, 0.0
    %v210 = vmax.f32 %v189, 0.0
    %v211 = vmax.f32 %v192, 0.0
    %v212 = vmax.f32 %v195, 0.0
    %213 = vmatpush.msra.mxu0 %v128
    %214 = vmatpush.msra.mxu0 %v127
    %215 = vmatpush.msra.mxu0 %v126
    %216 = vmatpush.msra.mxu0 %v125
    %217 = vmatpush.msra.mxu0 %v124
    %218 = vmatpush.msra.mxu0 %v123
    %219 = vmatpush.msra.mxu0 %v122
    %220 = vmatpush.msra.mxu0 %v121
    %221 = vmatpush.msra.mxu0 %v120
    %222 = vmatpush.msra.mxu0 %v119
    %223 = vmatpush.msra.mxu0 %v118
    %224 = vmatpush.msra.mxu0 %v117
    %225 = vmatpush.msra.mxu0 %v116
    %226 = vmatpush.msra.mxu0 %v115
    %227 = vmatpush.msra.mxu0 %v114
    %228 = vmatpush.msra.mxu0 %v113
    %229 = vmatmul.f32.gmra.mxu0 %v197
    %v230 = vpop.f32.mrf.mxu0
    %v231 = vadd.f32 0.0, %v230
    %232 = vmatmul.f32.gmra.mxu0 %v198
    %v233 = vpop.f32.mrf.mxu0
    %v234 = vadd.f32 0.0, %v233
    %235 = vmatmul.f32.gmra.mxu0 %v199
    %v236 = vpop.f32.mrf.mxu0
    %v237 = vadd.f32 0.0, %v236
    %238 = vmatmul.f32.gmra.mxu0 %v200
    %v239 = vpop.f32.mrf.mxu0
    %v240 = vadd.f32 0.0, %v239
    %241 = vmatmul.f32.gmra.mxu0 %v201
    %v242 = vpop.f32.mrf.mxu0
    %v243 = vadd.f32 0.0, %v242
    %244 = vmatmul.f32.gmra.mxu0 %v202
    %v245 = vpop.f32.mrf.mxu0
    %v246 = vadd.f32 0.0, %v245
    %247 = vmatmul.f32.gmra.mxu0 %v203
    %v248 = vpop.f32.mrf.mxu0
    %v249 = vadd.f32 0.0, %v248
    %250 = vmatmul.f32.gmra.mxu0 %v204
    %v251 = vpop.f32.mrf.mxu0
    %v252 = vadd.f32 0.0, %v251
    %253 = vmatmul.f32.gmra.mxu0 %v205
    %v254 = vpop.f32.mrf.mxu0
    %v255 = vadd.f32 0.0, %v254
    %256 = vmatmul.f32.gmra.mxu0 %v206
    %v257 = vpop.f32.mrf.mxu0
    %v258 = vadd.f32 0.0, %v257
    %259 = vmatmul.f32.gmra.mxu0 %v207
    %v260 = vpop.f32.mrf.mxu0
    %v261 = vadd.f32 0.0, %v260
    %262 = vmatmul.f32.gmra.mxu0 %v208
    %v263 = vpop.f32.mrf.mxu0
    %v264 = vadd.f32 0.0, %v263
    %265 = vmatmul.f32.gmra.mxu0 %v209
    %v266 = vpop.f32.mrf.mxu0
    %v267 = vadd.f32 0.0, %v266
    %268 = vmatmul.f32.gmra.mxu0 %v210
    %v269 = vpop.f32.mrf.mxu0
    %v270 = vadd.f32 0.0, %v269
    %271 = vmatmul.f32.gmra.mxu0 %v211
    %v272 = vpop.f32.mrf.mxu0
    %v273 = vadd.f32 0.0, %v272
    %274 = vmatmul.f32.gmra.mxu0 %v212
    %v275 = vpop.f32.mrf.mxu0
    %v276 = vadd.f32 0.0, %v275
    %277 = vdwg.mxu0
    %s278 = smul.u32 0, 128
    %v279 = vlaneseq
    %v280 = vshrl.u32 %v279, 7
    %v281 = vadd.s32 %v280, 8
    %v282 = vadd.s32 %v280, 16
    %v283 = vadd.s32 %v280, 24
    %v284 = vadd.s32 %v280, 32
    %v285 = vadd.s32 %v280, 40
    %v286 = vadd.s32 %v280, 48
    %v287 = vadd.s32 %v280, 56
    %v288 = vadd.s32 %v280, 64
    %v289 = vadd.s32 %v280, 72
    %v290 = vadd.s32 %v280, 80
    %v291 = vadd.s32 %v280, 88
    %v292 = vadd.s32 %v280, 96
    %v293 = vadd.s32 %v280, 104
    %v294 = vadd.s32 %v280, 112
    %v295 = vadd.s32 %v280, 120
    %v296 = vstv %s278
    %v297 = vadd.s32 %v296, %v280
    %v298 = vadd.s32 %v296, %v281
    %v299 = vadd.s32 %v296, %v282
    %v300 = vadd.s32 %v296, %v283
    %v301 = vadd.s32 %v296, %v284
    %v302 = vadd.s32 %v296, %v285
    %v303 = vadd.s32 %v296, %v286
    %v304 = vadd.s32 %v296, %v287
    %v305 = vadd.s32 %v296, %v288
    %v306 = vadd.s32 %v296, %v289
    %v307 = vadd.s32 %v296, %v290
    %v308 = vadd.s32 %v296, %v291
    %v309 = vadd.s32 %v296, %v292
    %v310 = vadd.s32 %v296, %v293
    %v311 = vadd.s32 %v296, %v294
    %v312 = vadd.s32 %v296, %v295
    %vm313 = vcmp.lt.s32.totalorder %v297, 128
    %vm314 = vcmp.lt.s32.totalorder %v298, 128
    %vm315 = vcmp.lt.s32.totalorder %v299, 128
    %vm316 = vcmp.lt.s32.totalorder %v300, 128
    %vm317 = vcmp.lt.s32.totalorder %v301, 128
    %vm318 = vcmp.lt.s32.totalorder %v302, 128
    %vm319 = vcmp.lt.s32.totalorder %v303, 128
    %vm320 = vcmp.lt.s32.totalorder %v304, 128
    %vm321 = vcmp.lt.s32.totalorder %v305, 128
    %vm322 = vcmp.lt.s32.totalorder %v306, 128
    %vm323 = vcmp.lt.s32.totalorder %v307, 128
    %vm324 = vcmp.lt.s32.totalorder %v308, 128
    %vm325 = vcmp.lt.s32.totalorder %v309, 128
    %vm326 = vcmp.lt.s32.totalorder %v310, 128
    %vm327 = vcmp.lt.s32.totalorder %v311, 128
    %vm328 = vcmp.lt.s32.totalorder %v312, 128
    %v329 = vsel %vm313, 1, 0
    %v330 = vsel %vm314, 1, 0
    %v331 = vsel %vm315, 1, 0
    %v332 = vsel %vm316, 1, 0
    %v333 = vsel %vm317, 1, 0
    %v334 = vsel %vm318, 1, 0
    %v335 = vsel %vm319, 1, 0
    %v336 = vsel %vm320, 1, 0
    %v337 = vsel %vm321, 1, 0
    %v338 = vsel %vm322, 1, 0
    %v339 = vsel %vm323, 1, 0
    %v340 = vsel %vm324, 1, 0
    %v341 = vsel %vm325, 1, 0
    %v342 = vsel %vm326, 1, 0
    %v343 = vsel %vm327, 1, 0
    %v344 = vsel %vm328, 1, 0
    %vm345 = vcmp.eq.s32.totalorder %v329, 1
    %vm346 = vcmp.eq.s32.totalorder %v330, 1
    %vm347 = vcmp.eq.s32.totalorder %v331, 1
    %vm348 = vcmp.eq.s32.totalorder %v332, 1
    %vm349 = vcmp.eq.s32.totalorder %v333, 1
    %vm350 = vcmp.eq.s32.totalorder %v334, 1
    %vm351 = vcmp.eq.s32.totalorder %v335, 1
    %vm352 = vcmp.eq.s32.totalorder %v336, 1
    %vm353 = vcmp.eq.s32.totalorder %v337, 1
    %vm354 = vcmp.eq.s32.totalorder %v338, 1
    %vm355 = vcmp.eq.s32.totalorder %v339, 1
    %vm356 = vcmp.eq.s32.totalorder %v340, 1
    %vm357 = vcmp.eq.s32.totalorder %v341, 1
    %vm358 = vcmp.eq.s32.totalorder %v342, 1
    %vm359 = vcmp.eq.s32.totalorder %v343, 1
    %vm360 = vcmp.eq.s32.totalorder %v344, 1
    %v361 = vsel %vm345, %v231, 0.0
    %v362 = vsel %vm346, %v234, 0.0
    %v363 = vsel %vm347, %v237, 0.0
    %v364 = vsel %vm348, %v240, 0.0
    %v365 = vsel %vm349, %v243, 0.0
    %v366 = vsel %vm350, %v246, 0.0
    %v367 = vsel %vm351, %v249, 0.0
    %v368 = vsel %vm352, %v252, 0.0
    %v369 = vsel %vm353, %v255, 0.0
    %v370 = vsel %vm354, %v258, 0.0
    %v371 = vsel %vm355, %v261, 0.0
    %v372 = vsel %vm356, %v264, 0.0
    %v373 = vsel %vm357, %v267, 0.0
    %v374 = vsel %vm358, %v270, 0.0
    %v375 = vsel %vm359, %v273, 0.0
    %v376 = vsel %vm360, %v276, 0.0
    %v377 = vld [vmem:[#allocation2] sm:$0x1]
    %v378 = vadd.f32 %v361, %v362
    %v379 = vadd.f32 %v378, %v363
    %v380 = vadd.f32 %v379, %v364
    %v381 = vadd.f32 %v380, %v365
    %v382 = vadd.f32 %v381, %v366
    %v383 = vadd.f32 %v382, %v367
    %v384 = vadd.f32 %v383, %v368
    %v385 = vadd.f32 %v384, %v369
    %v386 = vadd.f32 %v385, %v370
    %v387 = vadd.f32 %v386, %v371
    %v388 = vadd.f32 %v387, %v372
    %v389 = vadd.f32 %v388, %v373
    %v390 = vadd.f32 %v389, %v374
    %v391 = vadd.f32 %v390, %v375
    %v392 = vadd.f32 %v391, %v376
    %v393 = vrot.slane %v392, 4
    %v394 = vadd.f32 %v392, %v393
    %v395 = vrot.slane %v394, 2
    %v396 = vadd.f32 %v394, %v395
    %v397 = vrot.slane %v396, 1
    %v398 = vadd.f32 %v396, %v397
    %v399 = vadd.f32 %v377, %v398
    %400 = vst [vmem:[#allocation2] sm:$0x1] %v399
    %v401 = vld [vmem:[#allocation3] sm:$0x1]
    %v402 = vmul.f32 %v361, %v361
    %v403 = vmul.f32 %v362, %v362
    %v404 = vmul.f32 %v363, %v363
    %v405 = vmul.f32 %v364, %v364
    %v406 = vmul.f32 %v365, %v365
    %v407 = vmul.f32 %v366, %v366
    %v408 = vmul.f32 %v367, %v367
    %v409 = vmul.f32 %v368, %v368
    %v410 = vmul.f32 %v369, %v369
    %v411 = vmul.f32 %v370, %v370
    %v412 = vmul.f32 %v371, %v371
    %v413 = vmul.f32 %v372, %v372
    %v414 = vmul.f32 %v373, %v373
    %v415 = vmul.f32 %v374, %v374
    %v416 = vmul.f32 %v375, %v375
    %v417 = vmul.f32 %v376, %v376
    %v418 = vadd.f32 %v402, %v403
    %v419 = vadd.f32 %v418, %v404
    %v420 = vadd.f32 %v419, %v405
    %v421 = vadd.f32 %v420, %v406
    %v422 = vadd.f32 %v421, %v407
    %v423 = vadd.f32 %v422, %v408
    %v424 = vadd.f32 %v423, %v409
    %v425 = vadd.f32 %v424, %v410
    %v426 = vadd.f32 %v425, %v411
    %v427 = vadd.f32 %v426, %v412
    %v428 = vadd.f32 %v427, %v413
    %v429 = vadd.f32 %v428, %v414
    %v430 = vadd.f32 %v429, %v415
    %v431 = vadd.f32 %v430, %v416
    %v432 = vadd.f32 %v431, %v417
    %v433 = vrot.slane %v432, 4
    %v434 = vadd.f32 %v432, %v433
    %v435 = vrot.slane %v434, 2
    %v436 = vadd.f32 %v434, %v435
    %v437 = vrot.slane %v436, 1
    %v438 = vadd.f32 %v436, %v437
    %v439 = vadd.f32 %v401, %v438
    %440 = vst [vmem:[#allocation3] sm:$0x1] %v439
    // Predicated region
    $region42: #{tpu_custom_call.1} parent=1 // pred_check
      %p441 = pneg %p74
    $region43: #{tpu_custom_call.1} parent=1 // pred_check_branch
      %443 = sbr.rel (%p441) target = $region45
    $region44: #{tpu_custom_call.1} parent=1 // pred_region
      %v444 = vld [vmem:[#allocation2] sm:$0x1]
      %v445 = vmul.f32 %v444, 0.0078125
      %v446 = vld [vmem:[#allocation3] sm:$0x1]
      %v447 = vmul.f32 %v446, 0.0078125
      %v448 = vmul.f32 %v445, %v445
      %v449 = vsub.f32 %v447, %v448
      %v450 = vmax.f32 %v449, 0.0
      %v451 = vld [vmem:[%s4] sm:$0x1]
      %v452 = vadd.f32 %v450, 1e-05
      %v453 = vrsqrt.pop %v452
      %v454 = vmul.f32 %v453, %v452
      %v455 = vmul.f32 %v454, %v453
      %v456 = vmul.f32 0.5, %v455
      %v457 = vsub.f32 1.5, %v456
      %v458 = vmul.f32 %v453, %v457
      %vm459 = vweird.f32 %v452
      %vm460 = vweird.f32 %v453
      %vm461 = vmor %vm459, %vm460
      %v462 = vsel %vm461, %v453, %v458
      %v463 = vmul.f32 %v451, %v462
      %464 = vst [vmem:[#allocation10] sm:$0x1] %v463
      %v465 = vld [vmem:[%s5] sm:$0x1]
      %v466 = vmul.f32 %v445, %v463
      %v467 = vsub.f32 %v465, %v466
      %468 = vst [vmem:[#allocation11] sm:$0x1] %v467
    $region45: #{tpu_custom_call.1} parent=1 // pred_fallthru
      _
    // Predicated region
    $region46: #{tpu_custom_call.1} parent=1 // pred_check
      _
    $region47: #{tpu_custom_call.1} parent=1 // pred_check_branch
      %470 = sbr.rel (0) target = $region49
    $region48: #{tpu_custom_call.1} parent=1 // pred_region
      %472 = vsyncadd [#allocation6], 0
      %s474 = sshll.u32 [#allocation10], 4
      %s475 = int_to_ptr.vmem [resolvable:$true] %s474
      %s476 = sshll.u32 %s6, 4
      %s477 = int_to_ptr.hbm [resolvable:$true] %s476
      %479 = dma.vmem_to_hbm [thread:$0]  %s475, 16, %s477, [#allocation6]
    $region49: #{tpu_custom_call.1} parent=1 // pred_fallthru
      _
    // Predicated region
    $region50: #{tpu_custom_call.1} parent=1 // pred_check
      _
    $region51: #{tpu_custom_call.1} parent=1 // pred_check_branch
      %481 = sbr.rel (0) target = $region53
    $region52: #{tpu_custom_call.1} parent=1 // pred_region
      %483 = vsyncadd [#allocation12], 0
      %s485 = sshll.u32 [#allocation11], 4
      %s486 = int_to_ptr.vmem [resolvable:$true] %s485
      %s487 = sshll.u32 %s7, 4
      %s488 = int_to_ptr.hbm [resolvable:$true] %s487
      %490 = dma.vmem_to_hbm [thread:$0]  %s486, 16, %s488, [#allocation12]
    $region53: #{tpu_custom_call.1} parent=1 // pred_fallthru
      _
    // Predicated region
    $region54: #{tpu_custom_call.1} parent=1 // pred_check
      _
    $region55: #{tpu_custom_call.1} parent=1 // pred_check_branch
      %492 = sbr.rel (0) target = $region57
    $region56: #{tpu_custom_call.1} parent=1 // pred_region
      %494 = dma.done [#allocation6], 16
    $region57: #{tpu_custom_call.1} parent=1 // pred_fallthru
      _
    // Predicated region
    $region58: #{tpu_custom_call.1} parent=1 // pred_check
      _
    $region59: #{tpu_custom_call.1} parent=1 // pred_check_branch
      %496 = sbr.rel (0) target = $region61
    $region60: #{tpu_custom_call.1} parent=1 // pred_region
      %498 = dma.done [#allocation12], 16
    $region61: #{tpu_custom_call.1} parent=1 // pred_fallthru
      _
    %499 = vsyncpa [#allocation5], 1
    %500 = vsyncpa [#allocation8], 1
    %501 = vsyncpa [#allocation6], 1
    %502 = vsyncpa [#allocation12], 1

</llo_original>
